<compile_context>
chip_gen: v7x
topology: tpu7x:2x2x1
jax: 0.10.0
libtpu: 0.0.40
codegen_flags: <defaults>
</compile_context>

<pallas_src>
import jax
import jax.numpy as jnp
from jax.experimental import pallas as pl
from jax.experimental.pallas import tpu as pltpu

# ----- configuration (small shapes consistent with PINAT usage) -----
BS = 2          # batch
SEQ = 8         # nodes / sequence length
D_IN = 32       # d_model
D_HID = 64      # d_inner
LN_EPS = 1e-6


# =====================================================================
# Fused FFN kernel: w_1 -> ReLU -> w_2 -> (+residual) -> LayerNorm
# =====================================================================
def ffn_kernel(x_ref, w1_ref, b1_ref, w2_ref, b2_ref, gamma_ref, beta_ref,
               o_ref):
    x = x_ref[...]                                            # (rows, d_in)

    # w_1 + ReLU
    h = jnp.dot(x, w1_ref[...], preferred_element_type=jnp.float32) + b1_ref[...]
    h = jnp.maximum(h, 0.0)

    # w_2
    y = jnp.dot(h, w2_ref[...], preferred_element_type=jnp.float32) + b2_ref[...]

    # dropout = identity (eval mode); residual add
    res = y + x

    # LayerNorm(d_in, eps=1e-6)
    mean = jnp.mean(res, axis=-1, keepdims=True)
    cen = res - mean
    var = jnp.mean(cen * cen, axis=-1, keepdims=True)
    o_ref[...] = cen * jax.lax.rsqrt(var + LN_EPS) * gamma_ref[...] + beta_ref[...]


def positionwise_ffn(x, w1, b1, w2, b2, gamma, beta):
    """x: (bs, seq, d_in). Weights pre-transposed: w1 (d_in, d_hid), w2 (d_hid, d_in)."""
    bs, n, d_in = x.shape
    rows = bs * n
    x2 = x.reshape(rows, d_in)          # fold batch into the row/sublane dim

    def full_spec(arr):
        nd = arr.ndim
        return pl.BlockSpec(arr.shape, lambda i, _nd=nd: (0,) * _nd)

    out2 = pl.pallas_call(
        ffn_kernel,
        out_shape=jax.ShapeDtypeStruct((rows, d_in), jnp.float32),
        grid_spec=pltpu.PrefetchScalarGridSpec(
            num_scalar_prefetch=0,
            grid=(1,),                  # single step: whole problem resident
            in_specs=[full_spec(x2), full_spec(w1), full_spec(b1),
                      full_spec(w2), full_spec(b2),
                      full_spec(gamma), full_spec(beta)],
            out_specs=pl.BlockSpec((rows, d_in), lambda i: (0, 0)),
        ),
        compiler_params=pltpu.CompilerParams(
            dimension_semantics=("arbitrary",),
            vmem_limit_bytes=4 * 1024 * 1024,
        ),
    )(x2, w1, b1, w2, b2, gamma, beta)
    return out2.reshape(bs, n, d_in)


# =====================================================================
# Pure-JAX reference (for a sanity check)
# =====================================================================
def reference_forward(x, w1, b1, w2, b2, gamma, beta):
    h = jnp.maximum(x @ w1 + b1[0], 0.0)
    y = h @ w2 + b2[0]
    res = y + x
    mean = res.mean(-1, keepdims=True)
    var = ((res - mean) ** 2).mean(-1, keepdims=True)
    return (res - mean) / jnp.sqrt(var + LN_EPS) * gamma[0] + beta[0]


# =====================================================================
# Parameter init (deterministic, synthetic; weights stored as (in, out))
# =====================================================================
def init_params(key):
    ks = jax.random.split(key, 6)
    nrm = lambda k, s: (0.1 * jax.random.normal(k, s)).astype(jnp.float32)
    return {
        'w1': nrm(ks[0], (D_IN, D_HID)),
        'b1': nrm(ks[1], (1, D_HID)),
        'w2': nrm(ks[2], (D_HID, D_IN)),
        'b2': nrm(ks[3], (1, D_IN)),
        'gamma': (1.0 + 0.1 * jax.random.normal(ks[4], (1, D_IN))).astype(jnp.float32),
        'beta': nrm(ks[5], (1, D_IN)),
    }


if __name__ == "__main__":
    key = jax.random.PRNGKey(0)
    k_param, k_x = jax.random.split(key)
    p = init_params(k_param)

    # TODO(synk): nn.Dropout has no inference-time effect; implemented as identity.
    x = jax.random.normal(k_x, (BS, SEQ, D_IN), dtype=jnp.float32)

    out = positionwise_ffn(x, p['w1'], p['b1'], p['w2'], p['b2'],
                           p['gamma'], p['beta'])
    out = jax.block_until_ready(out)

    ref = reference_forward(x, p['w1'], p['b1'], p['w2'], p['b2'],
                            p['gamma'], p['beta'])

    assert out.shape == (BS, SEQ, D_IN)
    assert jnp.allclose(out, ref, rtol=1e-5, atol=1e-5)

    print("KERNEL_OK")
</pallas_src>

<mosaic_0001>
module attributes {stable_mosaic.version = 11 : i64} {
  func.func @ffn_kernel(%arg0: i32, %arg1: memref<16x32xf32, #tpu.memory_space<vmem>>, %arg2: memref<32x64xf32, #tpu.memory_space<vmem>>, %arg3: memref<1x64xf32, #tpu.memory_space<vmem>>, %arg4: memref<64x32xf32, #tpu.memory_space<vmem>>, %arg5: memref<1x32xf32, #tpu.memory_space<vmem>>, %arg6: memref<1x32xf32, #tpu.memory_space<vmem>>, %arg7: memref<1x32xf32, #tpu.memory_space<vmem>>, %arg8: memref<16x32xf32, #tpu.memory_space<vmem>>) attributes {dimension_semantics = [#tpu.dimension_semantics<arbitrary>], iteration_bounds = array<i64: 1>, scalar_prefetch = 0 : i64, scratch_operands = 0 : i64, tpu.core_type = #tpu.core_type<tc>, window_params = [{pipeline_mode = #tpu.pipeline_mode<synchronous>, transform_indices = @transform_0, window_bounds = array<i64: 16, 32>}, {pipeline_mode = #tpu.pipeline_mode<synchronous>, transform_indices = @transform_1, window_bounds = array<i64: 32, 64>}, {pipeline_mode = #tpu.pipeline_mode<synchronous>, transform_indices = @transform_2, window_bounds = array<i64: 1, 64>}, {pipeline_mode = #tpu.pipeline_mode<synchronous>, transform_indices = @transform_3, window_bounds = array<i64: 64, 32>}, {pipeline_mode = #tpu.pipeline_mode<synchronous>, transform_indices = @transform_4, window_bounds = array<i64: 1, 32>}, {pipeline_mode = #tpu.pipeline_mode<synchronous>, transform_indices = @transform_5, window_bounds = array<i64: 1, 32>}, {pipeline_mode = #tpu.pipeline_mode<synchronous>, transform_indices = @transform_6, window_bounds = array<i64: 1, 32>}, {pipeline_mode = #tpu.pipeline_mode<synchronous>, transform_indices = @transform_7, window_bounds = array<i64: 16, 32>}]} {
    %c0 = arith.constant 0 : index
    %c0_0 = arith.constant 0 : index
    %0 = vector.load %arg1[%c0, %c0_0] : memref<16x32xf32, #tpu.memory_space<vmem>>, vector<16x32xf32>
    %c0_1 = arith.constant 0 : index
    %c0_2 = arith.constant 0 : index
    %1 = vector.load %arg2[%c0_1, %c0_2] : memref<32x64xf32, #tpu.memory_space<vmem>>, vector<32x64xf32>
    %cst = arith.constant dense<0.000000e+00> : vector<16x64xf32>
    %2 = tpu.matmul %0, %1, %cst {dimension_numbers = #tpu.dot_dimension_numbers<[1], [0], [0], [1], [0, 0, 1, 1], [], []>} : vector<16x32xf32>, vector<32x64xf32>, vector<16x64xf32> -> vector<16x64xf32>
    %c0_3 = arith.constant 0 : index
    %c0_4 = arith.constant 0 : index
    %3 = vector.load %arg3[%c0_3, %c0_4] : memref<1x64xf32, #tpu.memory_space<vmem>>, vector<1x64xf32>
    %4 = vector.broadcast %3 : vector<1x64xf32> to vector<16x64xf32>
    %5 = arith.addf %2, %4 : vector<16x64xf32>
    %cst_5 = arith.constant 0.000000e+00 : f32
    %6 = vector.broadcast %cst_5 : f32 to vector<16x64xf32>
    %7 = arith.maximumf %5, %6 : vector<16x64xf32>
    %c0_6 = arith.constant 0 : index
    %c0_7 = arith.constant 0 : index
    %8 = vector.load %arg4[%c0_6, %c0_7] : memref<64x32xf32, #tpu.memory_space<vmem>>, vector<64x32xf32>
    %cst_8 = arith.constant dense<0.000000e+00> : vector<16x32xf32>
    %9 = tpu.matmul %7, %8, %cst_8 {dimension_numbers = #tpu.dot_dimension_numbers<[1], [0], [0], [1], [0, 0, 1, 1], [], []>} : vector<16x64xf32>, vector<64x32xf32>, vector<16x32xf32> -> vector<16x32xf32>
    %c0_9 = arith.constant 0 : index
    %c0_10 = arith.constant 0 : index
    %10 = vector.load %arg5[%c0_9, %c0_10] : memref<1x32xf32, #tpu.memory_space<vmem>>, vector<1x32xf32>
    %11 = vector.broadcast %10 : vector<1x32xf32> to vector<16x32xf32>
    %12 = arith.addf %9, %11 : vector<16x32xf32>
    %13 = arith.addf %12, %0 : vector<16x32xf32>
    %cst_11 = arith.constant dense<0.000000e+00> : vector<16xf32>
    %14 = vector.multi_reduction <add>, %13, %cst_11 [1] : vector<16x32xf32> to vector<16xf32>
    %15 = vector.shape_cast %14 : vector<16xf32> to vector<16x1xf32>
    %cst_12 = arith.constant 3.200000e+01 : f32
    %16 = vector.broadcast %cst_12 : f32 to vector<16x1xf32>
    %17 = arith.divf %15, %16 : vector<16x1xf32>
    %18 = vector.broadcast %17 : vector<16x1xf32> to vector<16x32xf32>
    %19 = arith.subf %13, %18 : vector<16x32xf32>
    %20 = arith.mulf %19, %19 : vector<16x32xf32>
    %cst_13 = arith.constant dense<0.000000e+00> : vector<16xf32>
    %21 = vector.multi_reduction <add>, %20, %cst_13 [1] : vector<16x32xf32> to vector<16xf32>
    %22 = vector.shape_cast %21 : vector<16xf32> to vector<16x1xf32>
    %cst_14 = arith.constant 3.200000e+01 : f32
    %23 = vector.broadcast %cst_14 : f32 to vector<16x1xf32>
    %24 = arith.divf %22, %23 : vector<16x1xf32>
    %cst_15 = arith.constant 9.99999997E-7 : f32
    %25 = vector.broadcast %cst_15 : f32 to vector<16x1xf32>
    %26 = arith.addf %24, %25 : vector<16x1xf32>
    %27 = math.rsqrt %26 : vector<16x1xf32>
    %28 = vector.broadcast %27 : vector<16x1xf32> to vector<16x32xf32>
    %29 = arith.mulf %19, %28 : vector<16x32xf32>
    %c0_16 = arith.constant 0 : index
    %c0_17 = arith.constant 0 : index
    %30 = vector.load %arg6[%c0_16, %c0_17] : memref<1x32xf32, #tpu.memory_space<vmem>>, vector<1x32xf32>
    %31 = vector.broadcast %30 : vector<1x32xf32> to vector<16x32xf32>
    %32 = arith.mulf %29, %31 : vector<16x32xf32>
    %c0_18 = arith.constant 0 : index
    %c0_19 = arith.constant 0 : index
    %33 = vector.load %arg7[%c0_18, %c0_19] : memref<1x32xf32, #tpu.memory_space<vmem>>, vector<1x32xf32>
    %34 = vector.broadcast %33 : vector<1x32xf32> to vector<16x32xf32>
    %35 = arith.addf %32, %34 : vector<16x32xf32>
    %c0_20 = arith.constant 0 : index
    %c0_21 = arith.constant 0 : index
    %36 = vector.load %arg8[%c0_20, %c0_21] : memref<16x32xf32, #tpu.memory_space<vmem>>, vector<16x32xf32>
    tpu.vector_store %arg8[%c0_20, %c0_21], %35 {strides = array<i32>} : memref<16x32xf32, #tpu.memory_space<vmem>>, vector<16x32xf32>,
    return
  }
  func.func @transform_0(%arg0: i32) -> (i32, i32) {
    %c0_i32 = arith.constant 0 : i32
    %c0_i32_0 = arith.constant 0 : i32
    %c0_i32_1 = arith.constant 0 : i32
    return %c0_i32, %c0_i32_0 : i32, i32
  }
  func.func @transform_1(%arg0: i32) -> (i32, i32) {
    %c0_i32 = arith.constant 0 : i32
    %c0_i32_0 = arith.constant 0 : i32
    %c0_i32_1 = arith.constant 0 : i32
    return %c0_i32, %c0_i32_0 : i32, i32
  }
  func.func @transform_2(%arg0: i32) -> (i32, i32) {
    %c0_i32 = arith.constant 0 : i32
    %c0_i32_0 = arith.constant 0 : i32
    %c0_i32_1 = arith.constant 0 : i32
    return %c0_i32, %c0_i32_0 : i32, i32
  }
  func.func @transform_3(%arg0: i32) -> (i32, i32) {
    %c0_i32 = arith.constant 0 : i32
    %c0_i32_0 = arith.constant 0 : i32
    %c0_i32_1 = arith.constant 0 : i32
    return %c0_i32, %c0_i32_0 : i32, i32
  }
  func.func @transform_4(%arg0: i32) -> (i32, i32) {
    %c0_i32 = arith.constant 0 : i32
    %c0_i32_0 = arith.constant 0 : i32
    %c0_i32_1 = arith.constant 0 : i32
    return %c0_i32, %c0_i32_0 : i32, i32
  }
  func.func @transform_5(%arg0: i32) -> (i32, i32) {
    %c0_i32 = arith.constant 0 : i32
    %c0_i32_0 = arith.constant 0 : i32
    %c0_i32_1 = arith.constant 0 : i32
    return %c0_i32, %c0_i32_0 : i32, i32
  }
  func.func @transform_6(%arg0: i32) -> (i32, i32) {
    %c0_i32 = arith.constant 0 : i32
    %c0_i32_0 = arith.constant 0 : i32
    %c0_i32_1 = arith.constant 0 : i32
    return %c0_i32, %c0_i32_0 : i32, i32
  }
  func.func @transform_7(%arg0: i32) -> (i32, i32) {
    %c0_i32 = arith.constant 0 : i32
    %c0_i32_0 = arith.constant 0 : i32
    %c0_i32_1 = arith.constant 0 : i32
    return %c0_i32, %c0_i32_0 : i32, i32
  }
}

</mosaic_0001>

<llo_original>
// kernel: tpu_custom_call.1
$region0: #{tpu_custom_call.1}
  #allocation0 [shape = 'u32[]', space=smem, size = 0x4, offset = 0x4, fixed_abs, tag = 'smem constant byte address 0x4 - core index']
  #allocation1 [shape = 'u32[144,128]{1,0:T(1,128)}', space=vmem, size = 0x12000, scoped, tag = 'internal scratch']
  %s0 = inlined_call_operand.vmem [shape: f32[16,32], index: 0, kind: input, shape index: {}]
  %s1 = inlined_call_operand.vmem [shape: f32[32,64], index: 1, kind: input, shape index: {}]
  %s2 = inlined_call_operand.vmem [shape: f32[1,64], index: 2, kind: input, shape index: {}]
  %s3 = inlined_call_operand.vmem [shape: f32[64,32], index: 3, kind: input, shape index: {}]
  %s4 = inlined_call_operand.vmem [shape: f32[1,32], index: 4, kind: input, shape index: {}]
  %s5 = inlined_call_operand.vmem [shape: f32[1,32], index: 5, kind: input, shape index: {}]
  %s6 = inlined_call_operand.vmem [shape: f32[1,32], index: 6, kind: input, shape index: {}]
  %s7 = inlined_call_operand.hbm [shape: f32[16,32], index: 7, kind: output, shape index: {}]
  %s8 = sld [smem:[#allocation0]]
  $region38: #{tpu_custom_call.1} parent=0
    _
  %s10 = ssub.s32 1, %s8
  %s11 = scalar_select 0, %s10, %s8
  $region1: #{tpu_custom_call.1} parent=0
    #allocation2 [shape = 'u8[8192]{0}', space=vmem, size = 0x2000, scoped, tag = 'output window, operand 0, single buffered']
    #allocation3 [shape = 's32[1]{0}', space=sflag, size = 0x4, scoped, tag = 'scoped memory for tpu_custom_call.1']
    %12 = vsyncpa [#allocation3], 0
    // Predicated region
    $region2: #{tpu_custom_call.1} parent=1 // pred_check
      _
    $region3: #{tpu_custom_call.1} parent=1 // pred_check_branch
      %14 = sbr.rel (0) target = $region5
    $region4: #{tpu_custom_call.1} parent=1 // pred_region
      _
    $region5: #{tpu_custom_call.1} parent=1 // pred_fallthru
      _
    // Predicated region
    $region6: #{tpu_custom_call.1} parent=1 // pred_check
      _
    $region7: #{tpu_custom_call.1} parent=1 // pred_check_branch
      %16 = sbr.rel (0) target = $region9
    $region8: #{tpu_custom_call.1} parent=1 // pred_region
      _
    $region9: #{tpu_custom_call.1} parent=1 // pred_fallthru
      _
    // Predicated region
    $region10: #{tpu_custom_call.1} parent=1 // pred_check
      _
    $region11: #{tpu_custom_call.1} parent=1 // pred_check_branch
      %18 = sbr.rel (0) target = $region13
    $region12: #{tpu_custom_call.1} parent=1 // pred_region
      _
    $region13: #{tpu_custom_call.1} parent=1 // pred_fallthru
      _
    // Predicated region
    $region14: #{tpu_custom_call.1} parent=1 // pred_check
      _
    $region15: #{tpu_custom_call.1} parent=1 // pred_check_branch
      %20 = sbr.rel (0) target = $region17
    $region16: #{tpu_custom_call.1} parent=1 // pred_region
      _
    $region17: #{tpu_custom_call.1} parent=1 // pred_fallthru
      _
    // Predicated region
    $region18: #{tpu_custom_call.1} parent=1 // pred_check
      _
    $region19: #{tpu_custom_call.1} parent=1 // pred_check_branch
      %22 = sbr.rel (0) target = $region21
    $region20: #{tpu_custom_call.1} parent=1 // pred_region
      _
    $region21: #{tpu_custom_call.1} parent=1 // pred_fallthru
      _
    // Predicated region
    $region22: #{tpu_custom_call.1} parent=1 // pred_check
      _
    $region23: #{tpu_custom_call.1} parent=1 // pred_check_branch
      %24 = sbr.rel (0) target = $region25
    $region24: #{tpu_custom_call.1} parent=1 // pred_region
      _
    $region25: #{tpu_custom_call.1} parent=1 // pred_fallthru
      _
    // Predicated region
    $region26: #{tpu_custom_call.1} parent=1 // pred_check
      _
    $region27: #{tpu_custom_call.1} parent=1 // pred_check_branch
      %26 = sbr.rel (0) target = $region29
    $region28: #{tpu_custom_call.1} parent=1 // pred_region
      _
    $region29: #{tpu_custom_call.1} parent=1 // pred_fallthru
      _
    %v27 = vld [vmem:[%s0] sm:$0xff]
    %v28 = vld [vmem:[%s0 + $0x8] sm:$0xff]
    %v29 = vld [vmem:[%s1] sm:$0xff]
    %v30 = vld [vmem:[%s1 + $0x8] sm:$0xff]
    %v31 = vld [vmem:[%s1 + $0x10] sm:$0xff]
    %v32 = vld [vmem:[%s1 + $0x18] sm:$0xff]
    %v33 = vld [vmem:[%s2] sm:$0x1]
    %v35 = vlaneseq
    %v36 = vshrl.u32 %v35, 7
    %v37 = vsub.s32 0, %v36
    %v38 = vrot.slane %v33, %v37
    %vm40 = vcmask 261120
    %v42 = vsel %vm40, %v27, 0
    %v45 = vsel %vm40, %v28, 0
    %47 = vmatprep.subr.mxu0 0.0
    %48 = vmatpush1.msra.mxu0 %v29
    %49 = vmatprep.subr.mxu0 0.0
    %50 = vmatpush1.msra.mxu0 %v30
    %51 = vmatprep.subr.mxu0 0.0
    %52 = vmatpush1.msra.mxu0 %v31
    %53 = vmatprep.subr.mxu0 0.0
    %54 = vmatpush1.msra.mxu0 %v32
    %55 = vmatprep.subr.mxu0 0.0
    %56 = vmatpush1.msra.mxu0 0.0
    %57 = vmatprep.subr.mxu0 0.0
    %58 = vmatpush1.msra.mxu0 0.0
    %59 = vmatprep.subr.mxu0 0.0
    %60 = vmatpush1.msra.mxu0 0.0
    %61 = vmatprep.subr.mxu0 0.0
    %62 = vmatpush1.msra.mxu0 0.0
    %63 = vmatprep.subr.mxu0 0.0
    %64 = vmatpush1.msra.mxu0 0.0
    %65 = vmatprep.subr.mxu0 0.0
    %66 = vmatpush1.msra.mxu0 0.0
    %67 = vmatprep.subr.mxu0 0.0
    %68 = vmatpush1.msra.mxu0 0.0
    %69 = vmatprep.subr.mxu0 0.0
    %70 = vmatpush1.msra.mxu0 0.0
    %71 = vmatprep.subr.mxu0 0.0
    %72 = vmatpush1.msra.mxu0 0.0
    %73 = vmatprep.subr.mxu0 0.0
    %74 = vmatpush1.msra.mxu0 0.0
    %75 = vmatprep.subr.mxu0 0.0
    %76 = vmatpush1.msra.mxu0 0.0
    %77 = vmatprep.subr.mxu0 0.0
    %78 = vmatpush1.msra.mxu0 0.0
    %79 = vmatprep.subr.mxu0 0.0
    %80 = vmatpush1.msra.mxu0 0.0
    %81 = vmatprep.subr.mxu0 0.0
    %82 = vmatpush1.msra.mxu0 0.0
    %83 = vmatprep.subr.mxu0 0.0
    %84 = vmatpush1.msra.mxu0 0.0
    %85 = vmatprep.subr.mxu0 0.0
    %86 = vmatpush1.msra.mxu0 0.0
    %87 = vmatprep.subr.mxu0 0.0
    %88 = vmatpush1.msra.mxu0 0.0
    %89 = vmatprep.subr.mxu0 0.0
    %90 = vmatpush1.msra.mxu0 0.0
    %91 = vmatprep.subr.mxu0 0.0
    %92 = vmatpush1.msra.mxu0 0.0
    %93 = vmatprep.subr.mxu0 0.0
    %94 = vmatpush1.msra.mxu0 0.0
    %95 = vmatprep.subr.mxu0 0.0
    %96 = vmatpush1.msra.mxu0 0.0
    %97 = vmatprep.subr.mxu0 0.0
    %98 = vmatpush1.msra.mxu0 0.0
    %99 = vmatprep.subr.mxu0 0.0
    %100 = vmatpush1.msra.mxu0 0.0
    %101 = vmatprep.subr.mxu0 0.0
    %102 = vmatpush1.msra.mxu0 0.0
    %103 = vmatprep.subr.mxu0 0.0
    %104 = vmatpush1.msra.mxu0 0.0
    %105 = vmatprep.subr.mxu0 0.0
    %106 = vmatpush1.msra.mxu0 0.0
    %107 = vmatprep.subr.mxu0 0.0
    %108 = vmatpush1.msra.mxu0 0.0
    %109 = vmatprep.subr.mxu0 0.0
    %110 = vmatpush1.msra.mxu0 0.0
    %111 = vmatprep.mubr.f32.mxu0 0.0
    %112 = vmatmul.mubr.f32.gmra.mrb[0].mxu0 %v42
    %v113 = vpop.f32.mrb[0].mxu0
    %v114 = vadd.f32 %v38, %v113
    %v115 = vpop.f32.mrb[0].mxu0
    %116 = vmatprep.mubr.f32.mxu0 0.0
    %117 = vmatmul.mubr.f32.gmra.mrb[0].mxu0 %v45
    %v118 = vpop.f32.mrb[0].mxu0
    %v119 = vadd.f32 %v38, %v118
    %v120 = vpop.f32.mrb[0].mxu0
    %121 = vdwg.mxu0
    %v122 = vmax.f32 %v114, 0.0
    %v123 = vmax.f32 %v119, 0.0
    %v124 = vld [vmem:[%s3] sm:$0xff]
    %v125 = vld [vmem:[%s3 + $0x8] sm:$0xff]
    %v126 = vld [vmem:[%s3 + $0x10] sm:$0xff]
    %v127 = vld [vmem:[%s3 + $0x18] sm:$0xff]
    %v128 = vld [vmem:[%s3 + $0x20] sm:$0xff]
    %v129 = vld [vmem:[%s3 + $0x28] sm:$0xff]
    %v130 = vld [vmem:[%s3 + $0x30] sm:$0xff]
    %v131 = vld [vmem:[%s3 + $0x38] sm:$0xff]
    %v132 = vld [vmem:[%s4] sm:$0x1]
    %v134 = vlaneseq
    %v135 = vshrl.u32 %v134, 7
    %v136 = vsub.s32 0, %v135
    %v137 = vrot.slane %v132, %v136
    %vm139 = vcmask 523264
    %v141 = vsel %vm139, %v122, 0
    %v144 = vsel %vm139, %v123, 0
    %146 = vmatprep.subr.mxu0 0.0
    %147 = vmatpush1.msra.mxu0 %v124
    %148 = vmatprep.subr.mxu0 0.0
    %149 = vmatpush1.msra.mxu0 %v125
    %150 = vmatprep.subr.mxu0 0.0
    %151 = vmatpush1.msra.mxu0 %v126
    %152 = vmatprep.subr.mxu0 0.0
    %153 = vmatpush1.msra.mxu0 %v127
    %154 = vmatprep.subr.mxu0 0.0
    %155 = vmatpush1.msra.mxu0 %v128
    %156 = vmatprep.subr.mxu0 0.0
    %157 = vmatpush1.msra.mxu0 %v129
    %158 = vmatprep.subr.mxu0 0.0
    %159 = vmatpush1.msra.mxu0 %v130
    %160 = vmatprep.subr.mxu0 0.0
    %161 = vmatpush1.msra.mxu0 %v131
    %162 = vmatprep.subr.mxu0 0.0
    %163 = vmatpush1.msra.mxu0 0.0
    %164 = vmatprep.subr.mxu0 0.0
    %165 = vmatpush1.msra.mxu0 0.0
    %166 = vmatprep.subr.mxu0 0.0
    %167 = vmatpush1.msra.mxu0 0.0
    %168 = vmatprep.subr.mxu0 0.0
    %169 = vmatpush1.msra.mxu0 0.0
    %170 = vmatprep.subr.mxu0 0.0
    %171 = vmatpush1.msra.mxu0 0.0
    %172 = vmatprep.subr.mxu0 0.0
    %173 = vmatpush1.msra.mxu0 0.0
    %174 = vmatprep.subr.mxu0 0.0
    %175 = vmatpush1.msra.mxu0 0.0
    %176 = vmatprep.subr.mxu0 0.0
    %177 = vmatpush1.msra.mxu0 0.0
    %178 = vmatprep.subr.mxu0 0.0
    %179 = vmatpush1.msra.mxu0 0.0
    %180 = vmatprep.subr.mxu0 0.0
    %181 = vmatpush1.msra.mxu0 0.0
    %182 = vmatprep.subr.mxu0 0.0
    %183 = vmatpush1.msra.mxu0 0.0
    %184 = vmatprep.subr.mxu0 0.0
    %185 = vmatpush1.msra.mxu0 0.0
    %186 = vmatprep.subr.mxu0 0.0
    %187 = vmatpush1.msra.mxu0 0.0
    %188 = vmatprep.subr.mxu0 0.0
    %189 = vmatpush1.msra.mxu0 0.0
    %190 = vmatprep.subr.mxu0 0.0
    %191 = vmatpush1.msra.mxu0 0.0
    %192 = vmatprep.subr.mxu0 0.0
    %193 = vmatpush1.msra.mxu0 0.0
    %194 = vmatprep.subr.mxu0 0.0
    %195 = vmatpush1.msra.mxu0 0.0
    %196 = vmatprep.subr.mxu0 0.0
    %197 = vmatpush1.msra.mxu0 0.0
    %198 = vmatprep.subr.mxu0 0.0
    %199 = vmatpush1.msra.mxu0 0.0
    %200 = vmatprep.subr.mxu0 0.0
    %201 = vmatpush1.msra.mxu0 0.0
    %202 = vmatprep.subr.mxu0 0.0
    %203 = vmatpush1.msra.mxu0 0.0
    %204 = vmatprep.subr.mxu0 0.0
    %205 = vmatpush1.msra.mxu0 0.0
    %206 = vmatprep.subr.mxu0 0.0
    %207 = vmatpush1.msra.mxu0 0.0
    %208 = vmatprep.subr.mxu0 0.0
    %209 = vmatpush1.msra.mxu0 0.0
    %210 = vmatprep.mubr.f32.mxu0 0.0
    %211 = vmatmul.mubr.f32.gmra.mrb[0].mxu0 %v141
    %v212 = vpop.f32.mrb[0].mxu0
    %v213 = vadd.f32 %v137, %v212
    %v214 = vpop.f32.mrb[0].mxu0
    %215 = vmatprep.mubr.f32.mxu0 0.0
    %216 = vmatmul.mubr.f32.gmra.mrb[0].mxu0 %v144
    %v217 = vpop.f32.mrb[0].mxu0
    %v218 = vadd.f32 %v137, %v217
    %v219 = vpop.f32.mrb[0].mxu0
    %220 = vdwg.mxu0
    %v221 = vadd.f32 %v213, %v27
    %v222 = vadd.f32 %v218, %v28
    %v223 = vsel %vm40, %v221, 0.0
    %224 = vadd.xlane.f32.xlu0 %v223
    %v225 = vpop.xlane.xlu0 %224
    %v226 = vsel %vm40, %v222, 0.0
    %227 = vadd.xlane.f32.xlu0 %v226
    %v228 = vpop.xlane.xlu0 %227
    %v229 = vrcp.pop 32.0
    %v230 = vmul.f32 %v225, %v229
    %v231 = vmul.f32 %v228, %v229
    %v232 = vsub.f32 %v221, %v230
    %v233 = vsub.f32 %v222, %v231
    %v234 = vmul.f32 %v232, %v232
    %v235 = vmul.f32 %v233, %v233
    %v236 = vsel %vm40, %v234, 0.0
    %237 = vadd.xlane.f32.xlu0 %v236
    %v238 = vpop.xlane.xlu0 %237
    %v239 = vsel %vm40, %v235, 0.0
    %240 = vadd.xlane.f32.xlu0 %v239
    %v241 = vpop.xlane.xlu0 %240
    %v242 = vmul.f32 %v238, %v229
    %v243 = vmul.f32 %v241, %v229
    %v244 = vadd.f32 %v242, 1e-06
    %v245 = vadd.f32 %v243, 1e-06
    %v246 = vrsqrt.pop %v244
    %v247 = vrsqrt.pop %v245
    %v248 = vmul.f32 %v232, %v246
    %v249 = vmul.f32 %v233, %v247
    %v250 = vld [vmem:[%s5] sm:$0x1]
    %v252 = vlaneseq
    %v253 = vshrl.u32 %v252, 7
    %v254 = vsub.s32 0, %v253
    %v255 = vrot.slane %v250, %v254
    %v257 = vmul.f32 %v248, %v255
    %v258 = vmul.f32 %v249, %v255
    %v259 = vld [vmem:[%s6] sm:$0x1]
    %v261 = vlaneseq
    %v262 = vshrl.u32 %v261, 7
    %v263 = vsub.s32 0, %v262
    %v264 = vrot.slane %v259, %v263
    %v266 = vadd.f32 %v257, %v264
    %v267 = vadd.f32 %v258, %v264
    %268 = vst.msk [vmem:[#allocation2] sm:$0xff] %vm40, %v266
    %269 = vst.msk [vmem:[#allocation2 + $0x8] sm:$0xff] %vm40, %v267
    // Predicated region
    $region30: #{tpu_custom_call.1} parent=1 // pred_check
      _
    $region31: #{tpu_custom_call.1} parent=1 // pred_check_branch
      %271 = sbr.rel (0) target = $region33
    $region32: #{tpu_custom_call.1} parent=1 // pred_region
      %s273 = ssub.s32 256, 256
      %274 = vsyncadd [#allocation3], %s273
      %s275 = sshll.u32 [#allocation2], 4
      %s276 = int_to_ptr.vmem [resolvable:$true] %s275
      %281 = dma.vmem_to_hbm [thread:$0]  %s276, 256, %s7, [#allocation3], 128, 128, 8
    $region33: #{tpu_custom_call.1} parent=1 // pred_fallthru
      _
    // Predicated region
    $region34: #{tpu_custom_call.1} parent=1 // pred_check
      _
    $region35: #{tpu_custom_call.1} parent=1 // pred_check_branch
      %283 = sbr.rel (0) target = $region37
    $region36: #{tpu_custom_call.1} parent=1 // pred_region
      %284 = dma.done [#allocation3], 256
    $region37: #{tpu_custom_call.1} parent=1 // pred_fallthru
      _
    %285 = vsyncpa [#allocation3], 1

</llo_original>
